<compile_context>
chip_gen: v7x
topology: tpu7x:2x2x1
jax: 0.10.0
libtpu: 0.0.40
codegen_flags: <defaults>
</compile_context>

<pallas_src>
import functools
from typing import NamedTuple

import jax
import jax.numpy as jnp
from jax.experimental import pallas as pl
from jax.experimental.pallas import tpu as pltpu


def _round_up(x, m):
    return (x + m - 1) // m * m


def _vmem_capacity_bytes():
    try:
        return int(pltpu.get_tpu_info().vmem_capacity_bytes)
    except Exception:
        return 64 * 2**20  # conservative per-core default (v7x)


def _vmem_bytes(tile_m, tile_hid, num_k, d_in_p, x_isz, w_isz, single_buf=True):
    """Rough per-step VMEM footprint (buffers + in-kernel temporaries)."""
    io = 2 * 2 * tile_m * d_in_p * x_isz                    # x + out, double-buffered
    wbuf = 1 if (single_buf and num_k == 1) else 2
    weights = wbuf * (2 * d_in_p + 1) * tile_hid * w_isz    # W1 chunk + W2 chunk + b1 chunk
    small = 2 * 3 * d_in_p * w_isz                          # b2 / gamma / beta
    temps = tile_m * tile_hid * (4 + w_isz)                 # f32 h + cast-to-weight-dtype copy
    temps += 3 * tile_m * d_in_p * 4                        # f32 acc scratch + y + centered
    return io + weights + small + temps


class FFNParams(NamedTuple):
    w1: jax.Array      # (d_in_p, d_hid_p)
    b1: jax.Array      # (1, d_hid_p)
    w2: jax.Array      # (d_hid_p, d_in_p)
    b2: jax.Array      # (1, d_in_p)
    gamma: jax.Array   # (1, d_in_p)
    beta: jax.Array    # (1, d_in_p)
    d_in: int
    d_hid: int
    d_in_p: int
    d_hid_p: int


def prepare_ffn_params(w1, b1, w2, b2, gamma, beta, lane=128):
    """Pad params to lane-dense (128-multiple) feature dims ONCE (cache & reuse)."""
    d_in, d_hid = w1.shape
    assert w2.shape == (d_hid, d_in)
    d_in_p = _round_up(d_in, lane)
    d_hid_p = _round_up(d_hid, lane)

    def pad2(a, r, c):
        pr, pc = r - a.shape[0], c - a.shape[1]
        return a if (pr == 0 and pc == 0) else jnp.pad(a, ((0, pr), (0, pc)))

    def pad_row(v, c):
        pc = c - v.shape[0]
        v = v if pc == 0 else jnp.pad(v, (0, pc))
        return v.reshape(1, c)

    return FFNParams(
        pad2(w1, d_in_p, d_hid_p), pad_row(b1, d_hid_p),
        pad2(w2, d_hid_p, d_in_p), pad_row(b2, d_in_p),
        pad_row(gamma, d_in_p), pad_row(beta, d_in_p),
        d_in, d_hid, d_in_p, d_hid_p)


def _ffn_ln_kernel(x_ref, w1_ref, b1_ref, w2_ref, b2_ref, g_ref, beta_ref,
                   o_ref, y_acc_ref, *, eps, d_in):
    k = pl.program_id(1)

    @pl.when(k == 0)
    def _():
        y_acc_ref[...] = jnp.zeros_like(y_acc_ref)

    # Operands stay in their native dtype (bf16 weights hit the bf16 MXU path);
    # accumulation is f32 via preferred_element_type.
    x = x_ref[...]
    h = jnp.dot(x, w1_ref[...], preferred_element_type=jnp.float32)
    h = h + b1_ref[...].astype(jnp.float32)
    h = jnp.maximum(h, 0.0)
    h = h.astype(w2_ref.dtype)
    y_acc_ref[...] += jnp.dot(h, w2_ref[...], preferred_element_type=jnp.float32)

    @pl.when(k == pl.num_programs(1) - 1)
    def _():
        # TODO(synk): dropout(p=0.1) omitted — module evaluated in inference mode
        # (identity); training parity needs pltpu.prng_seed + stateful_bernoulli.
        y = y_acc_ref[...] + b2_ref[...].astype(jnp.float32)
        y = y + x.astype(jnp.float32)                        # residual add (f32)

        # LayerNorm over the *real* d_in, eps=1e-6, biased variance (torch parity).
        # Padded feature columns of y are exactly zero, so the raw sum is correct;
        # the variance masks padded lanes with a (1, d_pad) iota broadcast over rows.
        d_pad = y.shape[-1]
        inv_d = 1.0 / d_in
        mean = jnp.sum(y, axis=-1, keepdims=True) * inv_d
        centered = y - mean
        if d_pad != d_in:  # static branch (feature padding present)
            col = jax.lax.broadcasted_iota(jnp.int32, (1, d_pad), 1)
            centered = jnp.where(col < d_in, centered, 0.0)
        var = jnp.sum(centered * centered, axis=-1, keepdims=True) * inv_d
        y_norm = centered * jax.lax.rsqrt(var + eps)
        o_ref[...] = (y_norm * g_ref[...].astype(jnp.float32)
                      + beta_ref[...].astype(jnp.float32)).astype(o_ref.dtype)


def apply_positionwise_feed_forward(x, params: FFNParams, *, eps=1e-6,
                                    tile_m=None, tile_hid=None):
    """x: [B, S, d_in] -> [B, S, d_in].  Fused FFN + residual + LayerNorm."""
    B, S, d_in = x.shape
    assert d_in == params.d_in
    d_in_p, d_hid_p = params.d_in_p, params.d_hid_p
    M = B * S

    x2d = x.reshape(M, d_in)
    if d_in_p != d_in:
        x2d = jnp.pad(x2d, ((0, 0), (0, d_in_p - d_in)))

    x_isz = x.dtype.itemsize
    w_isz = params.w1.dtype.itemsize
    vmem_cap = _vmem_capacity_bytes()
    budget = int(vmem_cap * 0.8)

    # ---- tile selection -----------------------------------------------------
    pack = max(8, 32 // x_isz)                    # sublane packing: f32->8, bf16->16
    if tile_m is None:
        tile_m = 256 if vmem_cap <= 80 * 2**20 else 512   # v7x vs v5e/v6e default
    tile_m_eff = min(_round_up(tile_m, pack), _round_up(M, pack))

    H = d_hid_p // 128
    hid_candidates = sorted((128 * d for d in range(1, H + 1) if H % d == 0),
                            reverse=True)        # divisors -> chunks tile d_hid_p exactly

    def est(tm, th, nk, single_buf=True):
        return _vmem_bytes(tm, th, nk, d_in_p, x_isz, w_isz, single_buf)

    if tile_hid is not None:
        req = max(128, int(tile_hid))
        tile_hid_eff = max(c for c in hid_candidates if c <= req)
    else:
        tile_hid_eff = hid_candidates[-1]         # 128 (always a candidate)
        for cand in hid_candidates:               # largest chunk that fits the budget
            if est(tile_m_eff, cand, d_hid_p // cand) * 5 // 4 <= budget:
                tile_hid_eff = cand
                break
    num_k = d_hid_p // tile_hid_eff
    while est(tile_m_eff, tile_hid_eff, num_k) * 5 // 4 > budget and tile_m_eff > pack:
        tile_m_eff = max(pack, _round_up(tile_m_eff // 2, pack))
    grid_m = (M + tile_m_eff - 1) // tile_m_eff   # partial last block handled by Pallas

    # vmem limit: cover worst-case (double-buffered) usage, clamp to chip capacity.
    vmem_limit = int(min(
        max(est(tile_m_eff, tile_hid_eff, num_k, single_buf=False) * 3 // 2, 32 * 2**20),
        int(vmem_cap * 0.9)))

    # ---- advisory cost estimate ----------------------------------------------
    flops = 4 * M * d_in_p * d_hid_p                              # two matmuls
    weight_bytes = 2 * d_in_p * d_hid_p * w_isz * (grid_m if num_k > 1 else 1)
    bytes_accessed = 2 * M * d_in_p * x_isz + weight_bytes
    cost = pl.CostEstimate(flops=int(flops), transcendentals=int(M),
                           bytes_accessed=int(bytes_accessed))

    kernel = functools.partial(_ffn_ln_kernel, eps=eps, d_in=d_in)

    def _run(single_buffer_invariants):
        # Grid-invariant operands get single-buffering (no dead second copy).
        inv_mode = pl.Buffered(1) if single_buffer_invariants else None
        w_mode = pl.Buffered(1) if (single_buffer_invariants and num_k == 1) else None

        def spec(shape, imap, mode):
            if mode is None:
                return pl.BlockSpec(shape, imap)
            return pl.BlockSpec(shape, imap, pipeline_mode=mode)

        in_specs = [
            pl.BlockSpec((tile_m_eff, d_in_p), lambda i, k: (i, 0)),          # x tile
            spec((d_in_p, tile_hid_eff), lambda i, k: (0, k), w_mode),        # W1 chunk
            spec((1, tile_hid_eff), lambda i, k: (0, k), w_mode),             # b1 chunk
            spec((tile_hid_eff, d_in_p), lambda i, k: (k, 0), w_mode),        # W2 chunk
            spec((1, d_in_p), lambda i, k: (0, 0), inv_mode),                 # b2
            spec((1, d_in_p), lambda i, k: (0, 0), inv_mode),                 # gamma
            spec((1, d_in_p), lambda i, k: (0, 0), inv_mode),                 # beta
        ]
        out = pl.pallas_call(
            kernel,
            out_shape=jax.ShapeDtypeStruct((M, d_in_p), x.dtype),
            grid_spec=pltpu.PrefetchScalarGridSpec(
                num_scalar_prefetch=0,
                grid=(grid_m, num_k),
                in_specs=in_specs,
                out_specs=pl.BlockSpec((tile_m_eff, d_in_p), lambda i, k: (i, 0)),
                scratch_shapes=[pltpu.VMEM((tile_m_eff, d_in_p), jnp.float32)],
            ),
            compiler_params=pltpu.CompilerParams(
                dimension_semantics=("parallel", "arbitrary"),
                vmem_limit_bytes=vmem_limit),
            cost_estimate=cost,
        )(x2d, params.w1, params.b1, params.w2, params.b2, params.gamma, params.beta)
        return jax.block_until_ready(out)

    try:
        out2d = _run(True)
    except Exception:
        # TODO(synk): pipeline_mode=pl.Buffered(1) not accepted by this JAX build;
        # fall back to default double-buffering of the grid-invariant operands.
        out2d = _run(False)

    if d_in_p != d_in:
        out2d = out2d[:, :d_in]
    return out2d.reshape(B, S, d_in)


def positionwise_feed_forward(x, w1, b1, w2, b2, gamma, beta, *, eps=1e-6,
                              tile_m=None, tile_hid=None):
    """Convenience wrapper; prefer prepare_ffn_params() once + apply_... per call."""
    params = prepare_ffn_params(w1, b1, w2, b2, gamma, beta)
    return apply_positionwise_feed_forward(x, params, eps=eps,
                                           tile_m=tile_m, tile_hid=tile_hid)


def _reference(x, w1, b1, w2, b2, gamma, beta, eps=1e-6):
    h = jnp.maximum(x @ w1 + b1, 0.0)
    y = h @ w2 + b2
    y = y + x
    mean = jnp.mean(y, axis=-1, keepdims=True)
    var = jnp.mean((y - mean) ** 2, axis=-1, keepdims=True)
    return (y - mean) * jax.lax.rsqrt(var + eps) * gamma + beta


if __name__ == "__main__":
    key = jax.random.PRNGKey(0)
    kx, k1, k2, k3, k4, kx2, k5, k6 = jax.random.split(key, 8)

    # --- test 1: f32, small shapes consistent with the module ----------------
    B, S, d_in, d_hid = 2, 8, 32, 64
    x = jax.random.normal(kx, (B, S, d_in), dtype=jnp.float32)
    w1 = jax.random.normal(k1, (d_in, d_hid), dtype=jnp.float32) * (1.0 / d_in ** 0.5)
    b1 = jax.random.normal(k2, (d_hid,), dtype=jnp.float32) * 0.01
    w2 = jax.random.normal(k3, (d_hid, d_in), dtype=jnp.float32) * (1.0 / d_hid ** 0.5)
    b2 = jax.random.normal(k4, (d_in,), dtype=jnp.float32) * 0.01
    gamma = jnp.ones((d_in,), dtype=jnp.float32)
    beta = jnp.zeros((d_in,), dtype=jnp.float32)

    out = jax.block_until_ready(
        positionwise_feed_forward(x, w1, b1, w2, b2, gamma, beta))
    ref = _reference(x, w1, b1, w2, b2, gamma, beta)
    assert out.shape == x.shape and out.dtype == x.dtype
    assert jnp.allclose(out, ref, atol=1e-4, rtol=1e-4), "f32 mismatch vs reference"

    # --- test 2: bf16 operands (MXU-native), f32 accumulation -----------------
    out_bf16 = jax.block_until_ready(positionwise_feed_forward(
        x.astype(jnp.bfloat16),
        w1.astype(jnp.bfloat16), b1.astype(jnp.bfloat16),
        w2.astype(jnp.bfloat16), b2.astype(jnp.bfloat16),
        gamma.astype(jnp.bfloat16), beta.astype(jnp.bfloat16)))
    assert out_bf16.dtype == jnp.bfloat16
    assert jnp.allclose(out_bf16.astype(jnp.float32), ref, atol=1e-1, rtol=1e-1), \
        "bf16 mismatch vs reference"

    # --- test 3: d_hid-chunked accumulator path + partial last M tile ---------
    B3, S3, d_in3, d_hid3 = 2, 7, 32, 256        # M=14 -> partial tile at tile_m=8
    x3 = jax.random.normal(kx2, (B3, S3, d_in3), dtype=jnp.float32)
    w1_3 = jax.random.normal(k5, (d_in3, d_hid3), dtype=jnp.float32) * (1.0 / d_in3 ** 0.5)
    w2_3 = jax.random.normal(k6, (d_hid3, d_in3), dtype=jnp.float32) * (1.0 / d_hid3 ** 0.5)
    b1_3 = jnp.zeros((d_hid3,), jnp.float32)
    b2_3 = jnp.zeros((d_in3,), jnp.float32)
    g3 = jnp.ones((d_in3,), jnp.float32)
    bt3 = jnp.zeros((d_in3,), jnp.float32)
    out3 = jax.block_until_ready(positionwise_feed_forward(
        x3, w1_3, b1_3, w2_3, b2_3, g3, bt3, tile_m=8, tile_hid=128))
    ref3 = _reference(x3, w1_3, b1_3, w2_3, b2_3, g3, bt3)
    assert jnp.allclose(out3, ref3, atol=1e-4, rtol=1e-4), "chunked-path mismatch"

    print("KERNEL_OK")
</pallas_src>

<mosaic_0001>
module attributes {stable_mosaic.version = 11 : i64} {
  func.func @_ffn_ln_kernel(%arg0: i32, %arg1: i32, %arg2: memref<16x128xf32, #tpu.memory_space<vmem>>, %arg3: memref<128x128xf32, #tpu.memory_space<vmem>>, %arg4: memref<1x128xf32, #tpu.memory_space<vmem>>, %arg5: memref<128x128xf32, #tpu.memory_space<vmem>>, %arg6: memref<1x128xf32, #tpu.memory_space<vmem>>, %arg7: memref<1x128xf32, #tpu.memory_space<vmem>>, %arg8: memref<1x128xf32, #tpu.memory_space<vmem>>, %arg9: memref<16x128xf32, #tpu.memory_space<vmem>>, %arg10: memref<16x128xf32, #tpu.memory_space<vmem>>) attributes {dimension_semantics = [#tpu.dimension_semantics<parallel>, #tpu.dimension_semantics<arbitrary>], iteration_bounds = array<i64: 1, 1>, scalar_prefetch = 0 : i64, scratch_operands = 1 : i64, tpu.core_type = #tpu.core_type<tc>, window_params = [{transform_indices = @transform_0, window_bounds = array<i64: 16, 128>}, {pipeline_mode = #tpu.pipeline_mode<synchronous>, transform_indices = @transform_1, window_bounds = array<i64: 128, 128>}, {pipeline_mode = #tpu.pipeline_mode<synchronous>, transform_indices = @transform_2, window_bounds = array<i64: 1, 128>}, {pipeline_mode = #tpu.pipeline_mode<synchronous>, transform_indices = @transform_3, window_bounds = array<i64: 128, 128>}, {pipeline_mode = #tpu.pipeline_mode<synchronous>, transform_indices = @transform_4, window_bounds = array<i64: 1, 128>}, {pipeline_mode = #tpu.pipeline_mode<synchronous>, transform_indices = @transform_5, window_bounds = array<i64: 1, 128>}, {pipeline_mode = #tpu.pipeline_mode<synchronous>, transform_indices = @transform_6, window_bounds = array<i64: 1, 128>}, {transform_indices = @transform_7, window_bounds = array<i64: 16, 128>}]} {
    %c0_i32 = arith.constant 0 : i32
    %0 = arith.cmpi eq, %arg1, %c0_i32 : i32
    %1 = arith.extui %0 : i1 to i32
    %c0_i32_0 = arith.constant 0 : i32
    %2 = arith.cmpi ne, %1, %c0_i32_0 : i32
    scf.if %2 {
      %cst_16 = arith.constant 0.000000e+00 : f32
      %19 = vector.broadcast %cst_16 : f32 to vector<16x128xf32>
      %c0_17 = arith.constant 0 : index
      %c0_18 = arith.constant 0 : index
      %20 = vector.load %arg10[%c0_17, %c0_18] : memref<16x128xf32, #tpu.memory_space<vmem>>, vector<16x128xf32>
      tpu.vector_store %arg10[%c0_17, %c0_18], %19 {strides = array<i32>} : memref<16x128xf32, #tpu.memory_space<vmem>>, vector<16x128xf32>,
    } else {
    }
    %c0 = arith.constant 0 : index
    %c0_1 = arith.constant 0 : index
    %3 = vector.load %arg2[%c0, %c0_1] : memref<16x128xf32, #tpu.memory_space<vmem>>, vector<16x128xf32>
    %c0_2 = arith.constant 0 : index
    %c0_3 = arith.constant 0 : index
    %4 = vector.load %arg3[%c0_2, %c0_3] : memref<128x128xf32, #tpu.memory_space<vmem>>, vector<128x128xf32>
    %cst = arith.constant dense<0.000000e+00> : vector<16x128xf32>
    %5 = tpu.matmul %3, %4, %cst {dimension_numbers = #tpu.dot_dimension_numbers<[1], [0], [0], [1], [0, 0, 1, 1], [], []>} : vector<16x128xf32>, vector<128x128xf32>, vector<16x128xf32> -> vector<16x128xf32>
    %c0_4 = arith.constant 0 : index
    %c0_5 = arith.constant 0 : index
    %6 = vector.load %arg4[%c0_4, %c0_5] : memref<1x128xf32, #tpu.memory_space<vmem>>, vector<1x128xf32>
    %7 = vector.broadcast %6 : vector<1x128xf32> to vector<16x128xf32>
    %8 = arith.addf %5, %7 : vector<16x128xf32>
    %cst_6 = arith.constant 0.000000e+00 : f32
    %9 = vector.broadcast %cst_6 : f32 to vector<16x128xf32>
    %10 = arith.maximumf %8, %9 : vector<16x128xf32>
    %c0_7 = arith.constant 0 : index
    %c0_8 = arith.constant 0 : index
    %11 = vector.load %arg10[%c0_7, %c0_8] : memref<16x128xf32, #tpu.memory_space<vmem>>, vector<16x128xf32>
    %c0_9 = arith.constant 0 : index
    %c0_10 = arith.constant 0 : index
    %12 = vector.load %arg5[%c0_9, %c0_10] : memref<128x128xf32, #tpu.memory_space<vmem>>, vector<128x128xf32>
    %cst_11 = arith.constant dense<0.000000e+00> : vector<16x128xf32>
    %13 = tpu.matmul %10, %12, %cst_11 {dimension_numbers = #tpu.dot_dimension_numbers<[1], [0], [0], [1], [0, 0, 1, 1], [], []>} : vector<16x128xf32>, vector<128x128xf32>, vector<16x128xf32> -> vector<16x128xf32>
    %14 = arith.addf %11, %13 : vector<16x128xf32>
    %c0_12 = arith.constant 0 : index
    %c0_13 = arith.constant 0 : index
    %15 = vector.load %arg10[%c0_12, %c0_13] : memref<16x128xf32, #tpu.memory_space<vmem>>, vector<16x128xf32>
    tpu.vector_store %arg10[%c0_12, %c0_13], %14 {strides = array<i32>} : memref<16x128xf32, #tpu.memory_space<vmem>>, vector<16x128xf32>,
    %c0_i32_14 = arith.constant 0 : i32
    %16 = arith.cmpi eq, %arg1, %c0_i32_14 : i32
    %17 = arith.extui %16 : i1 to i32
    %c0_i32_15 = arith.constant 0 : i32
    %18 = arith.cmpi ne, %17, %c0_i32_15 : i32
    scf.if %18 {
      %c0_16 = arith.constant 0 : index
      %c0_17 = arith.constant 0 : index
      %19 = vector.load %arg10[%c0_16, %c0_17] : memref<16x128xf32, #tpu.memory_space<vmem>>, vector<16x128xf32>
      %c0_18 = arith.constant 0 : index
      %c0_19 = arith.constant 0 : index
      %20 = vector.load %arg6[%c0_18, %c0_19] : memref<1x128xf32, #tpu.memory_space<vmem>>, vector<1x128xf32>
      %21 = vector.broadcast %20 : vector<1x128xf32> to vector<16x128xf32>
      %22 = arith.addf %19, %21 : vector<16x128xf32>
      %23 = arith.addf %22, %3 : vector<16x128xf32>
      %cst_20 = arith.constant dense<0.000000e+00> : vector<16xf32>
      %24 = vector.multi_reduction <add>, %23, %cst_20 [1] : vector<16x128xf32> to vector<16xf32>
      %25 = vector.shape_cast %24 : vector<16xf32> to vector<16x1xf32>
      %cst_21 = arith.constant 3.125000e-02 : f32
      %26 = vector.broadcast %cst_21 : f32 to vector<16x1xf32>
      %27 = arith.mulf %25, %26 : vector<16x1xf32>
      %28 = vector.broadcast %27 : vector<16x1xf32> to vector<16x128xf32>
      %29 = arith.subf %23, %28 : vector<16x128xf32>
      %30 = tpu.iota {dimensions = array<i32: 1>} : vector<1x128xi32>
      %c32_i32 = arith.constant 32 : i32
      %31 = vector.broadcast %c32_i32 : i32 to vector<1x128xi32>
      %32 = arith.cmpi slt, %30, %31 : vector<1x128xi32>
      %cst_22 = arith.constant 0.000000e+00 : f32
      %33 = vector.shape_cast %32 : vector<1x128xi1> to vector<1x128xi1>
      %34 = vector.broadcast %33 : vector<1x128xi1> to vector<16x128xi1>
      %35 = vector.broadcast %cst_22 : f32 to vector<16x128xf32>
      %36 = arith.select %34, %29, %35 : vector<16x128xi1>, vector<16x128xf32>
      %37 = arith.mulf %36, %36 : vector<16x128xf32>
      %cst_23 = arith.constant dense<0.000000e+00> : vector<16xf32>
      %38 = vector.multi_reduction <add>, %37, %cst_23 [1] : vector<16x128xf32> to vector<16xf32>
      %39 = vector.shape_cast %38 : vector<16xf32> to vector<16x1xf32>
      %cst_24 = arith.constant 3.125000e-02 : f32
      %40 = vector.broadcast %cst_24 : f32 to vector<16x1xf32>
      %41 = arith.mulf %39, %40 : vector<16x1xf32>
      %cst_25 = arith.constant 9.99999997E-7 : f32
      %42 = vector.broadcast %cst_25 : f32 to vector<16x1xf32>
      %43 = arith.addf %41, %42 : vector<16x1xf32>
      %44 = math.rsqrt %43 : vector<16x1xf32>
      %45 = vector.broadcast %44 : vector<16x1xf32> to vector<16x128xf32>
      %46 = arith.mulf %36, %45 : vector<16x128xf32>
      %c0_26 = arith.constant 0 : index
      %c0_27 = arith.constant 0 : index
      %47 = vector.load %arg7[%c0_26, %c0_27] : memref<1x128xf32, #tpu.memory_space<vmem>>, vector<1x128xf32>
      %48 = vector.broadcast %47 : vector<1x128xf32> to vector<16x128xf32>
      %49 = arith.mulf %46, %48 : vector<16x128xf32>
      %c0_28 = arith.constant 0 : index
      %c0_29 = arith.constant 0 : index
      %50 = vector.load %arg8[%c0_28, %c0_29] : memref<1x128xf32, #tpu.memory_space<vmem>>, vector<1x128xf32>
      %51 = vector.broadcast %50 : vector<1x128xf32> to vector<16x128xf32>
      %52 = arith.addf %49, %51 : vector<16x128xf32>
      %c0_30 = arith.constant 0 : index
      %c0_31 = arith.constant 0 : index
      %53 = vector.load %arg9[%c0_30, %c0_31] : memref<16x128xf32, #tpu.memory_space<vmem>>, vector<16x128xf32>
      tpu.vector_store %arg9[%c0_30, %c0_31], %52 {strides = array<i32>} : memref<16x128xf32, #tpu.memory_space<vmem>>, vector<16x128xf32>,
    } else {
    }
    return
  }
  func.func @transform_0(%arg0: i32, %arg1: i32) -> (i32, i32) {
    %c0_i32 = arith.constant 0 : i32
    %c0_i32_0 = arith.constant 0 : i32
    return %arg0, %c0_i32 : i32, i32
  }
  func.func @transform_1(%arg0: i32, %arg1: i32) -> (i32, i32) {
    %c0_i32 = arith.constant 0 : i32
    %c0_i32_0 = arith.constant 0 : i32
    return %c0_i32, %arg1 : i32, i32
  }
  func.func @transform_2(%arg0: i32, %arg1: i32) -> (i32, i32) {
    %c0_i32 = arith.constant 0 : i32
    %c0_i32_0 = arith.constant 0 : i32
    return %c0_i32, %arg1 : i32, i32
  }
  func.func @transform_3(%arg0: i32, %arg1: i32) -> (i32, i32) {
    %c0_i32 = arith.constant 0 : i32
    %c0_i32_0 = arith.constant 0 : i32
    return %arg1, %c0_i32 : i32, i32
  }
  func.func @transform_4(%arg0: i32, %arg1: i32) -> (i32, i32) {
    %c0_i32 = arith.constant 0 : i32
    %c0_i32_0 = arith.constant 0 : i32
    %c0_i32_1 = arith.constant 0 : i32
    return %c0_i32, %c0_i32_0 : i32, i32
  }
  func.func @transform_5(%arg0: i32, %arg1: i32) -> (i32, i32) {
    %c0_i32 = arith.constant 0 : i32
    %c0_i32_0 = arith.constant 0 : i32
    %c0_i32_1 = arith.constant 0 : i32
    return %c0_i32, %c0_i32_0 : i32, i32
  }
  func.func @transform_6(%arg0: i32, %arg1: i32) -> (i32, i32) {
    %c0_i32 = arith.constant 0 : i32
    %c0_i32_0 = arith.constant 0 : i32
    %c0_i32_1 = arith.constant 0 : i32
    return %c0_i32, %c0_i32_0 : i32, i32
  }
  func.func @transform_7(%arg0: i32, %arg1: i32) -> (i32, i32) {
    %c0_i32 = arith.constant 0 : i32
    %c0_i32_0 = arith.constant 0 : i32
    return %arg0, %c0_i32 : i32, i32
  }
}

module attributes {stable_mosaic.version = 11 : i64} {
  func.func @_ffn_ln_kernel(%arg0: i32, %arg1: i32, %arg2: memref<16x128xf32, #tpu.memory_space<vmem>>, %arg3: memref<128x128xf32, #tpu.memory_space<vmem>>, %arg4: memref<1x128xf32, #tpu.memory_space<vmem>>, %arg5: memref<128x128xf32, #tpu.memory_space<vmem>>, %arg6: memref<1x128xf32, #tpu.memory_space<vmem>>, %arg7: memref<1x128xf32, #tpu.memory_space<vmem>>, %arg8: memref<1x128xf32, #tpu.memory_space<vmem>>, %arg9: memref<16x128xf32, #tpu.memory_space<vmem>>, %arg10: memref<16x128xf32, #tpu.memory_space<vmem>>) attributes {dimension_semantics = [#tpu.dimension_semantics<parallel>, #tpu.dimension_semantics<arbitrary>], iteration_bounds = array<i64: 1, 1>, scalar_prefetch = 0 : i64, scratch_operands = 1 : i64, tpu.core_type = #tpu.core_type<tc>, window_params = [{transform_indices = @transform_0, window_bounds = array<i64: 16, 128>}, {transform_indices = @transform_1, window_bounds = array<i64: 128, 128>}, {transform_indices = @transform_2, window_bounds = array<i64: 1, 128>}, {transform_indices = @transform_3, window_bounds = array<i64: 128, 128>}, {pipeline_mode = #tpu.pipeline_mode<synchronous>, transform_indices = @transform_4, window_bounds = array<i64: 1, 128>}, {pipeline_mode = #tpu.pipeline_mode<synchronous>, transform_indices = @transform_5, window_bounds = array<i64: 1, 128>}, {pipeline_mode = #tpu.pipeline_mode<synchronous>, transform_indices = @transform_6, window_bounds = array<i64: 1, 128>}, {transform_indices = @transform_7, window_bounds = array<i64: 16, 128>}]} {
    %c0_i32 = arith.constant 0 : i32
    %0 = arith.cmpi eq, %arg1, %c0_i32 : i32
    %1 = arith.extui %0 : i1 to i32
    %c0_i32_0 = arith.constant 0 : i32
    %2 = arith.cmpi ne, %1, %c0_i32_0 : i32
    scf.if %2 {
      %cst_16 = arith.constant 0.000000e+00 : f32
      %19 = vector.broadcast %cst_16 : f32 to vector<16x128xf32>
      %c0_17 = arith.constant 0 : index
      %c0_18 = arith.constant 0 : index
      %20 = vector.load %arg10[%c0_17, %c0_18] : memref<16x128xf32, #tpu.memory_space<vmem>>, vector<16x128xf32>
      tpu.vector_store %arg10[%c0_17, %c0_18], %19 {strides = array<i32>} : memref<16x128xf32, #tpu.memory_space<vmem>>, vector<16x128xf32>,
    } else {
    }
    %c0 = arith.constant 0 : index
    %c0_1 = arith.constant 0 : index
    %3 = vector.load %arg2[%c0, %c0_1] : memref<16x128xf32, #tpu.memory_space<vmem>>, vector<16x128xf32>
    %c0_2 = arith.constant 0 : index
    %c0_3 = arith.constant 0 : index
    %4 = vector.load %arg3[%c0_2, %c0_3] : memref<128x128xf32, #tpu.memory_space<vmem>>, vector<128x128xf32>
    %cst = arith.constant dense<0.000000e+00> : vector<16x128xf32>
    %5 = tpu.matmul %3, %4, %cst {dimension_numbers = #tpu.dot_dimension_numbers<[1], [0], [0], [1], [0, 0, 1, 1], [], []>} : vector<16x128xf32>, vector<128x128xf32>, vector<16x128xf32> -> vector<16x128xf32>
    %c0_4 = arith.constant 0 : index
    %c0_5 = arith.constant 0 : index
    %6 = vector.load %arg4[%c0_4, %c0_5] : memref<1x128xf32, #tpu.memory_space<vmem>>, vector<1x128xf32>
    %7 = vector.broadcast %6 : vector<1x128xf32> to vector<16x128xf32>
    %8 = arith.addf %5, %7 : vector<16x128xf32>
    %cst_6 = arith.constant 0.000000e+00 : f32
    %9 = vector.broadcast %cst_6 : f32 to vector<16x128xf32>
    %10 = arith.maximumf %8, %9 : vector<16x128xf32>
    %c0_7 = arith.constant 0 : index
    %c0_8 = arith.constant 0 : index
    %11 = vector.load %arg10[%c0_7, %c0_8] : memref<16x128xf32, #tpu.memory_space<vmem>>, vector<16x128xf32>
    %c0_9 = arith.constant 0 : index
    %c0_10 = arith.constant 0 : index
    %12 = vector.load %arg5[%c0_9, %c0_10] : memref<128x128xf32, #tpu.memory_space<vmem>>, vector<128x128xf32>
    %cst_11 = arith.constant dense<0.000000e+00> : vector<16x128xf32>
    %13 = tpu.matmul %10, %12, %cst_11 {dimension_numbers = #tpu.dot_dimension_numbers<[1], [0], [0], [1], [0, 0, 1, 1], [], []>} : vector<16x128xf32>, vector<128x128xf32>, vector<16x128xf32> -> vector<16x128xf32>
    %14 = arith.addf %11, %13 : vector<16x128xf32>
    %c0_12 = arith.constant 0 : index
    %c0_13 = arith.constant 0 : index
    %15 = vector.load %arg10[%c0_12, %c0_13] : memref<16x128xf32, #tpu.memory_space<vmem>>, vector<16x128xf32>
    tpu.vector_store %arg10[%c0_12, %c0_13], %14 {strides = array<i32>} : memref<16x128xf32, #tpu.memory_space<vmem>>, vector<16x128xf32>,
    %c0_i32_14 = arith.constant 0 : i32
    %16 = arith.cmpi eq, %arg1, %c0_i32_14 : i32
    %17 = arith.extui %16 : i1 to i32
    %c0_i32_15 = arith.constant 0 : i32
    %18 = arith.cmpi ne, %17, %c0_i32_15 : i32
    scf.if %18 {
      %c0_16 = arith.constant 0 : index
      %c0_17 = arith.constant 0 : index
      %19 = vector.load %arg10[%c0_16, %c0_17] : memref<16x128xf32, #tpu.memory_space<vmem>>, vector<16x128xf32>
      %c0_18 = arith.constant 0 : index
      %c0_19 = arith.constant 0 : index
      %20 = vector.load %arg6[%c0_18, %c0_19] : memref<1x128xf32, #tpu.memory_space<vmem>>, vector<1x128xf32>
      %21 = vector.broadcast %20 : vector<1x128xf32> to vector<16x128xf32>
      %22 = arith.addf %19, %21 : vector<16x128xf32>
      %23 = arith.addf %22, %3 : vector<16x128xf32>
      %cst_20 = arith.constant dense<0.000000e+00> : vector<16xf32>
      %24 = vector.multi_reduction <add>, %23, %cst_20 [1] : vector<16x128xf32> to vector<16xf32>
      %25 = vector.shape_cast %24 : vector<16xf32> to vector<16x1xf32>
      %cst_21 = arith.constant 3.125000e-02 : f32
      %26 = vector.broadcast %cst_21 : f32 to vector<16x1xf32>
      %27 = arith.mulf %25, %26 : vector<16x1xf32>
      %28 = vector.broadcast %27 : vector<16x1xf32> to vector<16x128xf32>
      %29 = arith.subf %23, %28 : vector<16x128xf32>
      %30 = tpu.iota {dimensions = array<i32: 1>} : vector<1x128xi32>
      %c32_i32 = arith.constant 32 : i32
      %31 = vector.broadcast %c32_i32 : i32 to vector<1x128xi32>
      %32 = arith.cmpi slt, %30, %31 : vector<1x128xi32>
      %cst_22 = arith.constant 0.000000e+00 : f32
      %33 = vector.shape_cast %32 : vector<1x128xi1> to vector<1x128xi1>
      %34 = vector.broadcast %33 : vector<1x128xi1> to vector<16x128xi1>
      %35 = vector.broadcast %cst_22 : f32 to vector<16x128xf32>
      %36 = arith.select %34, %29, %35 : vector<16x128xi1>, vector<16x128xf32>
      %37 = arith.mulf %36, %36 : vector<16x128xf32>
      %cst_23 = arith.constant dense<0.000000e+00> : vector<16xf32>
      %38 = vector.multi_reduction <add>, %37, %cst_23 [1] : vector<16x128xf32> to vector<16xf32>
      %39 = vector.shape_cast %38 : vector<16xf32> to vector<16x1xf32>
      %cst_24 = arith.constant 3.125000e-02 : f32
      %40 = vector.broadcast %cst_24 : f32 to vector<16x1xf32>
      %41 = arith.mulf %39, %40 : vector<16x1xf32>
      %cst_25 = arith.constant 9.99999997E-7 : f32
      %42 = vector.broadcast %cst_25 : f32 to vector<16x1xf32>
      %43 = arith.addf %41, %42 : vector<16x1xf32>
      %44 = math.rsqrt %43 : vector<16x1xf32>
      %45 = vector.broadcast %44 : vector<16x1xf32> to vector<16x128xf32>
      %46 = arith.mulf %36, %45 : vector<16x128xf32>
      %c0_26 = arith.constant 0 : index
      %c0_27 = arith.constant 0 : index
      %47 = vector.load %arg7[%c0_26, %c0_27] : memref<1x128xf32, #tpu.memory_space<vmem>>, vector<1x128xf32>
      %48 = vector.broadcast %47 : vector<1x128xf32> to vector<16x128xf32>
      %49 = arith.mulf %46, %48 : vector<16x128xf32>
      %c0_28 = arith.constant 0 : index
      %c0_29 = arith.constant 0 : index
      %50 = vector.load %arg8[%c0_28, %c0_29] : memref<1x128xf32, #tpu.memory_space<vmem>>, vector<1x128xf32>
      %51 = vector.broadcast %50 : vector<1x128xf32> to vector<16x128xf32>
      %52 = arith.addf %49, %51 : vector<16x128xf32>
      %c0_30 = arith.constant 0 : index
      %c0_31 = arith.constant 0 : index
      %53 = vector.load %arg9[%c0_30, %c0_31] : memref<16x128xf32, #tpu.memory_space<vmem>>, vector<16x128xf32>
      tpu.vector_store %arg9[%c0_30, %c0_31], %52 {strides = array<i32>} : memref<16x128xf32, #tpu.memory_space<vmem>>, vector<16x128xf32>,
    } else {
    }
    return
  }
  func.func @transform_0(%arg0: i32, %arg1: i32) -> (i32, i32) {
    %c0_i32 = arith.constant 0 : i32
    %c0_i32_0 = arith.constant 0 : i32
    return %arg0, %c0_i32 : i32, i32
  }
  func.func @transform_1(%arg0: i32, %arg1: i32) -> (i32, i32) {
    %c0_i32 = arith.constant 0 : i32
    %c0_i32_0 = arith.constant 0 : i32
    return %c0_i32, %arg1 : i32, i32
  }
  func.func @transform_2(%arg0: i32, %arg1: i32) -> (i32, i32) {
    %c0_i32 = arith.constant 0 : i32
    %c0_i32_0 = arith.constant 0 : i32
    return %c0_i32, %arg1 : i32, i32
  }
  func.func @transform_3(%arg0: i32, %arg1: i32) -> (i32, i32) {
    %c0_i32 = arith.constant 0 : i32
    %c0_i32_0 = arith.constant 0 : i32
    return %arg1, %c0_i32 : i32, i32
  }
  func.func @transform_4(%arg0: i32, %arg1: i32) -> (i32, i32) {
    %c0_i32 = arith.constant 0 : i32
    %c0_i32_0 = arith.constant 0 : i32
    %c0_i32_1 = arith.constant 0 : i32
    return %c0_i32, %c0_i32_0 : i32, i32
  }
  func.func @transform_5(%arg0: i32, %arg1: i32) -> (i32, i32) {
    %c0_i32 = arith.constant 0 : i32
    %c0_i32_0 = arith.constant 0 : i32
    %c0_i32_1 = arith.constant 0 : i32
    return %c0_i32, %c0_i32_0 : i32, i32
  }
  func.func @transform_6(%arg0: i32, %arg1: i32) -> (i32, i32) {
    %c0_i32 = arith.constant 0 : i32
    %c0_i32_0 = arith.constant 0 : i32
    %c0_i32_1 = arith.constant 0 : i32
    return %c0_i32, %c0_i32_0 : i32, i32
  }
  func.func @transform_7(%arg0: i32, %arg1: i32) -> (i32, i32) {
    %c0_i32 = arith.constant 0 : i32
    %c0_i32_0 = arith.constant 0 : i32
    return %arg0, %c0_i32 : i32, i32
  }
}

</mosaic_0001>

<llo_original>
// kernel: tpu_custom_call.1
$region0: #{tpu_custom_call.1}
  #allocation0 [shape = 'u32[]', space=smem, size = 0x4, offset = 0x4, fixed_abs, tag = 'smem constant byte address 0x4 - core index']
  #allocation1 [shape = 'u32[144,128]{1,0:T(1,128)}', space=vmem, size = 0x12000, scoped, tag = 'internal scratch']
  #allocation2 [shape = 'f32[16,128]{1,0:T(8,128)}', space=vmem, size = 0x2000, scoped, tag = 'scratch operand']
  %s0 = inlined_call_operand.hbm [shape: f32[16,128], index: 0, kind: input, shape index: {}]
  %s1 = inlined_call_operand.hbm [shape: f32[128,128], index: 1, kind: input, shape index: {}]
  %s2 = inlined_call_operand.vmem [shape: f32[1,128], index: 2, kind: input, shape index: {}]
  %s3 = inlined_call_operand.hbm [shape: f32[128,128], index: 3, kind: input, shape index: {}]
  %s4 = inlined_call_operand.vmem [shape: f32[1,128], index: 4, kind: input, shape index: {}]
  %s5 = inlined_call_operand.vmem [shape: f32[1,128], index: 5, kind: input, shape index: {}]
  %s6 = inlined_call_operand.vmem [shape: f32[1,128], index: 6, kind: input, shape index: {}]
  %s7 = inlined_call_operand.hbm [shape: f32[16,128], index: 7, kind: output, shape index: {}]
  %s8 = sld [smem:[#allocation0]]
  $region58: #{tpu_custom_call.1} parent=0
    _
  %s10 = ssub.s32 1, %s8
  %s11 = scalar_select 0, %s10, %s8
  $region1: #{tpu_custom_call.1} parent=0
    #allocation3 [shape = 'u8[8192]{0}', space=vmem, size = 0x2000, scoped, tag = 'input window, operand 0, single buffered']
    #allocation4 [shape = 's32[1]{0}', space=sflag, size = 0x4, scoped, tag = 'scoped memory for tpu_custom_call.1']
    #allocation5 [shape = 's32[1]{0}', space=sflag, size = 0x4, scoped, tag = 'scoped memory for tpu_custom_call.1']
    #allocation6 [shape = 'u8[65536]{0}', space=vmem, size = 0x10000, scoped, tag = 'input window, operand 1, single buffered']
    #allocation7 [shape = 's32[1]{0}', space=sflag, size = 0x4, scoped, tag = 'scoped memory for tpu_custom_call.1']
    #allocation8 [shape = 'u8[65536]{0}', space=vmem, size = 0x10000, scoped, tag = 'input window, operand 3, single buffered']
    #allocation9 [shape = 'u8[8192]{0}', space=vmem, size = 0x2000, scoped, tag = 'output window, operand 0, single buffered']
    %12 = vsyncpa [#allocation4], 0
    %13 = vsyncpa [#allocation7], 0
    %14 = vsyncpa [#allocation5], 0
    // Predicated region
    $region2: #{tpu_custom_call.1} parent=1 // pred_check
      _
    $region3: #{tpu_custom_call.1} parent=1 // pred_check_branch
      %16 = sbr.rel (0) target = $region5
    $region4: #{tpu_custom_call.1} parent=1 // pred_region
      %s18 = ssub.s32 256, 256
      %19 = vsyncadd [#allocation4], %s18
      %s20 = sshll.u32 [#allocation3], 4
      %s21 = int_to_ptr.vmem [resolvable:$true] %s20
      %26 = dma.hbm_to_vmem [thread:$0]  %s0, 256, %s21, [#allocation4], 128, 128, 8
    $region5: #{tpu_custom_call.1} parent=1 // pred_fallthru
      _
    // Predicated region
    $region6: #{tpu_custom_call.1} parent=1 // pred_check
      _
    $region7: #{tpu_custom_call.1} parent=1 // pred_check_branch
      %28 = sbr.rel (0) target = $region9
    $region8: #{tpu_custom_call.1} parent=1 // pred_region
      %s30 = ssub.s32 2048, 2048
      %31 = vsyncadd [#allocation7], %s30
      %s32 = sshll.u32 [#allocation6], 4
      %s33 = int_to_ptr.vmem [resolvable:$true] %s32
      %38 = dma.hbm_to_vmem [thread:$0]  %s1, 2048, %s33, [#allocation7], 128, 128, 8
    $region9: #{tpu_custom_call.1} parent=1 // pred_fallthru
      _
    // Predicated region
    $region10: #{tpu_custom_call.1} parent=1 // pred_check
      _
    $region11: #{tpu_custom_call.1} parent=1 // pred_check_branch
      %40 = sbr.rel (0) target = $region13
    $region12: #{tpu_custom_call.1} parent=1 // pred_region
      _
    $region13: #{tpu_custom_call.1} parent=1 // pred_fallthru
      _
    // Predicated region
    $region14: #{tpu_custom_call.1} parent=1 // pred_check
      _
    $region15: #{tpu_custom_call.1} parent=1 // pred_check_branch
      %42 = sbr.rel (0) target = $region17
    $region16: #{tpu_custom_call.1} parent=1 // pred_region
      %s44 = ssub.s32 2048, 2048
      %45 = vsyncadd [#allocation7], %s44
      %s46 = sshll.u32 [#allocation8], 4
      %s47 = int_to_ptr.vmem [resolvable:$true] %s46
      %52 = dma.hbm_to_vmem [thread:$0]  %s3, 2048, %s47, [#allocation7], 128, 128, 8
    $region17: #{tpu_custom_call.1} parent=1 // pred_fallthru
      _
    // Predicated region
    $region18: #{tpu_custom_call.1} parent=1 // pred_check
      _
    $region19: #{tpu_custom_call.1} parent=1 // pred_check_branch
      %54 = sbr.rel (0) target = $region21
    $region20: #{tpu_custom_call.1} parent=1 // pred_region
      _
    $region21: #{tpu_custom_call.1} parent=1 // pred_fallthru
      _
    // Predicated region
    $region22: #{tpu_custom_call.1} parent=1 // pred_check
      _
    $region23: #{tpu_custom_call.1} parent=1 // pred_check_branch
      %56 = sbr.rel (0) target = $region25
    $region24: #{tpu_custom_call.1} parent=1 // pred_region
      _
    $region25: #{tpu_custom_call.1} parent=1 // pred_fallthru
      _
    // Predicated region
    $region26: #{tpu_custom_call.1} parent=1 // pred_check
      _
    $region27: #{tpu_custom_call.1} parent=1 // pred_check_branch
      %58 = sbr.rel (0) target = $region29
    $region28: #{tpu_custom_call.1} parent=1 // pred_region
      _
    $region29: #{tpu_custom_call.1} parent=1 // pred_fallthru
      _
    // Predicated region
    $region30: #{tpu_custom_call.1} parent=1 // pred_check
      _
    $region31: #{tpu_custom_call.1} parent=1 // pred_check_branch
      %60 = sbr.rel (0) target = $region33
    $region32: #{tpu_custom_call.1} parent=1 // pred_region
      %61 = dma.done [#allocation4], 256
    $region33: #{tpu_custom_call.1} parent=1 // pred_fallthru
      _
    // Predicated region
    $region34: #{tpu_custom_call.1} parent=1 // pred_check
      _
    $region35: #{tpu_custom_call.1} parent=1 // pred_check_branch
      %63 = sbr.rel (0) target = $region37
    $region36: #{tpu_custom_call.1} parent=1 // pred_region
      %64 = dma.done [#allocation7], 2048
    $region37: #{tpu_custom_call.1} parent=1 // pred_fallthru
      _
    // Predicated region
    $region38: #{tpu_custom_call.1} parent=1 // pred_check
      _
    $region39: #{tpu_custom_call.1} parent=1 // pred_check_branch
      %66 = sbr.rel (0) target = $region41
    $region40: #{tpu_custom_call.1} parent=1 // pred_region
      %67 = dma.done [#allocation7], 2048
    $region41: #{tpu_custom_call.1} parent=1 // pred_fallthru
      _
    %p68 = scmp.eq.s32.totalorder 0, 0
    // Predicated region
    $region42: #{tpu_custom_call.1} parent=1 // pred_check
      %p69 = pneg %p68
    $region43: #{tpu_custom_call.1} parent=1 // pred_check_branch
      %71 = sbr.rel (%p69) target = $region45
    $region44: #{tpu_custom_call.1} parent=1 // pred_region
      %72 = vst [vmem:[#allocation2] sm:$0xff] 0.0
      %73 = vst [vmem:[#allocation2 + $0x8] sm:$0xff] 0.0
    $region45: #{tpu_custom_call.1} parent=1 // pred_fallthru
      _
    %v74 = vld [vmem:[#allocation3] sm:$0xff]
    %v75 = vld [vmem:[#allocation3 + $0x8] sm:$0xff]
    %v76 = vld [vmem:[#allocation6] sm:$0xff]
    %v77 = vld [vmem:[#allocation6 + $0x8] sm:$0xff]
    %v78 = vld [vmem:[#allocation6 + $0x10] sm:$0xff]
    %v79 = vld [vmem:[#allocation6 + $0x18] sm:$0xff]
    %v80 = vld [vmem:[#allocation6 + $0x20] sm:$0xff]
    %v81 = vld [vmem:[#allocation6 + $0x28] sm:$0xff]
    %v82 = vld [vmem:[#allocation6 + $0x30] sm:$0xff]
    %v83 = vld [vmem:[#allocation6 + $0x38] sm:$0xff]
    %v84 = vld [vmem:[#allocation6 + $0x40] sm:$0xff]
    %v85 = vld [vmem:[#allocation6 + $0x48] sm:$0xff]
    %v86 = vld [vmem:[#allocation6 + $0x50] sm:$0xff]
    %v87 = vld [vmem:[#allocation6 + $0x58] sm:$0xff]
    %v88 = vld [vmem:[#allocation6 + $0x60] sm:$0xff]
    %v89 = vld [vmem:[#allocation6 + $0x68] sm:$0xff]
    %v90 = vld [vmem:[#allocation6 + $0x70] sm:$0xff]
    %v91 = vld [vmem:[#allocation6 + $0x78] sm:$0xff]
    %v92 = vld [vmem:[%s2] sm:$0x1]
    %v94 = vlaneseq
    %v95 = vshrl.u32 %v94, 7
    %v96 = vsub.s32 0, %v95
    %v97 = vrot.slane %v92, %v96
    %99 = vmatprep.subr.mxu0 0.0
    %100 = vmatpush1.msra.mxu0 %v76
    %101 = vmatprep.subr.mxu0 0.0
    %102 = vmatpush1.msra.mxu0 %v77
    %103 = vmatprep.subr.mxu0 0.0
    %104 = vmatpush1.msra.mxu0 %v78
    %105 = vmatprep.subr.mxu0 0.0
    %106 = vmatpush1.msra.mxu0 %v79
    %107 = vmatprep.subr.mxu0 0.0
    %108 = vmatpush1.msra.mxu0 %v80
    %109 = vmatprep.subr.mxu0 0.0
    %110 = vmatpush1.msra.mxu0 %v81
    %111 = vmatprep.subr.mxu0 0.0
    %112 = vmatpush1.msra.mxu0 %v82
    %113 = vmatprep.subr.mxu0 0.0
    %114 = vmatpush1.msra.mxu0 %v83
    %115 = vmatprep.subr.mxu0 0.0
    %116 = vmatpush1.msra.mxu0 %v84
    %117 = vmatprep.subr.mxu0 0.0
    %118 = vmatpush1.msra.mxu0 %v85
    %119 = vmatprep.subr.mxu0 0.0
    %120 = vmatpush1.msra.mxu0 %v86
    %121 = vmatprep.subr.mxu0 0.0
    %122 = vmatpush1.msra.mxu0 %v87
    %123 = vmatprep.subr.mxu0 0.0
    %124 = vmatpush1.msra.mxu0 %v88
    %125 = vmatprep.subr.mxu0 0.0
    %126 = vmatpush1.msra.mxu0 %v89
    %127 = vmatprep.subr.mxu0 0.0
    %128 = vmatpush1.msra.mxu0 %v90
    %129 = vmatprep.subr.mxu0 0.0
    %130 = vmatpush1.msra.mxu0 %v91
    %131 = vmatprep.subr.mxu0 0.0
    %132 = vmatpush1.msra.mxu0 0.0
    %133 = vmatprep.subr.mxu0 0.0
    %134 = vmatpush1.msra.mxu0 0.0
    %135 = vmatprep.subr.mxu0 0.0
    %136 = vmatpush1.msra.mxu0 0.0
    %137 = vmatprep.subr.mxu0 0.0
    %138 = vmatpush1.msra.mxu0 0.0
    %139 = vmatprep.subr.mxu0 0.0
    %140 = vmatpush1.msra.mxu0 0.0
    %141 = vmatprep.subr.mxu0 0.0
    %142 = vmatpush1.msra.mxu0 0.0
    %143 = vmatprep.subr.mxu0 0.0
    %144 = vmatpush1.msra.mxu0 0.0
    %145 = vmatprep.subr.mxu0 0.0
    %146 = vmatpush1.msra.mxu0 0.0
    %147 = vmatprep.subr.mxu0 0.0
    %148 = vmatpush1.msra.mxu0 0.0
    %149 = vmatprep.subr.mxu0 0.0
    %150 = vmatpush1.msra.mxu0 0.0
    %151 = vmatprep.subr.mxu0 0.0
    %152 = vmatpush1.msra.mxu0 0.0
    %153 = vmatprep.subr.mxu0 0.0
    %154 = vmatpush1.msra.mxu0 0.0
    %155 = vmatprep.subr.mxu0 0.0
    %156 = vmatpush1.msra.mxu0 0.0
    %157 = vmatprep.subr.mxu0 0.0
    %158 = vmatpush1.msra.mxu0 0.0
    %159 = vmatprep.subr.mxu0 0.0
    %160 = vmatpush1.msra.mxu0 0.0
    %161 = vmatprep.subr.mxu0 0.0
    %162 = vmatpush1.msra.mxu0 0.0
    %163 = vmatprep.mubr.f32.mxu0 0.0
    %164 = vmatmul.mubr.f32.gmra.mrb[0].mxu0 %v74
    %v165 = vpop.f32.mrb[0].mxu0
    %v166 = vadd.f32 %v97, %v165
    %v167 = vpop.f32.mrb[0].mxu0
    %168 = vmatprep.mubr.f32.mxu0 0.0
    %169 = vmatmul.mubr.f32.gmra.mrb[0].mxu0 %v75
    %v170 = vpop.f32.mrb[0].mxu0
    %v171 = vadd.f32 %v97, %v170
    %v172 = vpop.f32.mrb[0].mxu0
    %173 = vdwg.mxu0
    %v174 = vmax.f32 %v166, 0.0
    %v175 = vmax.f32 %v171, 0.0
    %v176 = vld [vmem:[#allocation2] sm:$0xff]
    %v177 = vld [vmem:[#allocation2 + $0x8] sm:$0xff]
    %v178 = vld [vmem:[#allocation8] sm:$0xff]
    %v179 = vld [vmem:[#allocation8 + $0x8] sm:$0xff]
    %v180 = vld [vmem:[#allocation8 + $0x10] sm:$0xff]
    %v181 = vld [vmem:[#allocation8 + $0x18] sm:$0xff]
    %v182 = vld [vmem:[#allocation8 + $0x20] sm:$0xff]
    %v183 = vld [vmem:[#allocation8 + $0x28] sm:$0xff]
    %v184 = vld [vmem:[#allocation8 + $0x30] sm:$0xff]
    %v185 = vld [vmem:[#allocation8 + $0x38] sm:$0xff]
    %v186 = vld [vmem:[#allocation8 + $0x40] sm:$0xff]
    %v187 = vld [vmem:[#allocation8 + $0x48] sm:$0xff]
    %v188 = vld [vmem:[#allocation8 + $0x50] sm:$0xff]
    %v189 = vld [vmem:[#allocation8 + $0x58] sm:$0xff]
    %v190 = vld [vmem:[#allocation8 + $0x60] sm:$0xff]
    %v191 = vld [vmem:[#allocation8 + $0x68] sm:$0xff]
    %v192 = vld [vmem:[#allocation8 + $0x70] sm:$0xff]
    %v193 = vld [vmem:[#allocation8 + $0x78] sm:$0xff]
    %194 = vmatprep.subr.mxu0 0.0
    %195 = vmatpush1.msra.mxu0 %v178
    %196 = vmatprep.subr.mxu0 0.0
    %197 = vmatpush1.msra.mxu0 %v179
    %198 = vmatprep.subr.mxu0 0.0
    %199 = vmatpush1.msra.mxu0 %v180
    %200 = vmatprep.subr.mxu0 0.0
    %201 = vmatpush1.msra.mxu0 %v181
    %202 = vmatprep.subr.mxu0 0.0
    %203 = vmatpush1.msra.mxu0 %v182
    %204 = vmatprep.subr.mxu0 0.0
    %205 = vmatpush1.msra.mxu0 %v183
    %206 = vmatprep.subr.mxu0 0.0
    %207 = vmatpush1.msra.mxu0 %v184
    %208 = vmatprep.subr.mxu0 0.0
    %209 = vmatpush1.msra.mxu0 %v185
    %210 = vmatprep.subr.mxu0 0.0
    %211 = vmatpush1.msra.mxu0 %v186
    %212 = vmatprep.subr.mxu0 0.0
    %213 = vmatpush1.msra.mxu0 %v187
    %214 = vmatprep.subr.mxu0 0.0
    %215 = vmatpush1.msra.mxu0 %v188
    %216 = vmatprep.subr.mxu0 0.0
    %217 = vmatpush1.msra.mxu0 %v189
    %218 = vmatprep.subr.mxu0 0.0
    %219 = vmatpush1.msra.mxu0 %v190
    %220 = vmatprep.subr.mxu0 0.0
    %221 = vmatpush1.msra.mxu0 %v191
    %222 = vmatprep.subr.mxu0 0.0
    %223 = vmatpush1.msra.mxu0 %v192
    %224 = vmatprep.subr.mxu0 0.0
    %225 = vmatpush1.msra.mxu0 %v193
    %226 = vmatprep.subr.mxu0 0.0
    %227 = vmatpush1.msra.mxu0 0.0
    %228 = vmatprep.subr.mxu0 0.0
    %229 = vmatpush1.msra.mxu0 0.0
    %230 = vmatprep.subr.mxu0 0.0
    %231 = vmatpush1.msra.mxu0 0.0
    %232 = vmatprep.subr.mxu0 0.0
    %233 = vmatpush1.msra.mxu0 0.0
    %234 = vmatprep.subr.mxu0 0.0
    %235 = vmatpush1.msra.mxu0 0.0
    %236 = vmatprep.subr.mxu0 0.0
    %237 = vmatpush1.msra.mxu0 0.0
    %238 = vmatprep.subr.mxu0 0.0
    %239 = vmatpush1.msra.mxu0 0.0
    %240 = vmatprep.subr.mxu0 0.0
    %241 = vmatpush1.msra.mxu0 0.0
    %242 = vmatprep.subr.mxu0 0.0
    %243 = vmatpush1.msra.mxu0 0.0
    %244 = vmatprep.subr.mxu0 0.0
    %245 = vmatpush1.msra.mxu0 0.0
    %246 = vmatprep.subr.mxu0 0.0
    %247 = vmatpush1.msra.mxu0 0.0
    %248 = vmatprep.subr.mxu0 0.0
    %249 = vmatpush1.msra.mxu0 0.0
    %250 = vmatprep.subr.mxu0 0.0
    %251 = vmatpush1.msra.mxu0 0.0
    %252 = vmatprep.subr.mxu0 0.0
    %253 = vmatpush1.msra.mxu0 0.0
    %254 = vmatprep.subr.mxu0 0.0
    %255 = vmatpush1.msra.mxu0 0.0
    %256 = vmatprep.subr.mxu0 0.0
    %257 = vmatpush1.msra.mxu0 0.0
    %258 = vmatprep.mubr.f32.mxu0 0.0
    %259 = vmatmul.mubr.f32.gmra.mrb[0].mxu0 %v174
    %v260 = vpop.f32.mrb[0].mxu0
    %v261 = vadd.f32 0.0, %v260
    %v262 = vpop.f32.mrb[0].mxu0
    %263 = vmatprep.mubr.f32.mxu0 0.0
    %264 = vmatmul.mubr.f32.gmra.mrb[0].mxu0 %v175
    %v265 = vpop.f32.mrb[0].mxu0
    %v266 = vadd.f32 0.0, %v265
    %v267 = vpop.f32.mrb[0].mxu0
    %268 = vdwg.mxu0
    %v269 = vadd.f32 %v176, %v261
    %v270 = vadd.f32 %v177, %v266
    %271 = vst [vmem:[#allocation2] sm:$0xff] %v269
    %272 = vst [vmem:[#allocation2 + $0x8] sm:$0xff] %v270
    // Predicated region
    $region46: #{tpu_custom_call.1} parent=1 // pred_check
      %p273 = pneg %p68
    $region47: #{tpu_custom_call.1} parent=1 // pred_check_branch
      %275 = sbr.rel (%p273) target = $region49
    $region48: #{tpu_custom_call.1} parent=1 // pred_region
      %v276 = vld [vmem:[#allocation2] sm:$0xff]
      %v277 = vld [vmem:[#allocation2 + $0x8] sm:$0xff]
      %v278 = vld [vmem:[%s4] sm:$0x1]
      %v280 = vlaneseq
      %v281 = vshrl.u32 %v280, 7
      %v282 = vsub.s32 0, %v281
      %v283 = vrot.slane %v278, %v282
      %v285 = vadd.f32 %v276, %v283
      %v286 = vadd.f32 %v277, %v283
      %v287 = vadd.f32 %v285, %v74
      %v288 = vadd.f32 %v286, %v75
      %289 = vadd.xlane.f32.xlu0 %v287
      %v290 = vpop.xlane.xlu0 %289
      %291 = vadd.xlane.f32.xlu0 %v288
      %v292 = vpop.xlane.xlu0 %291
      %v293 = vmul.f32 %v290, 0.03125
      %v294 = vmul.f32 %v292, 0.03125
      %v295 = vsub.f32 %v287, %v293
      %v296 = vsub.f32 %v288, %v294
      %v297 = vlaneseq
      %v298 = vand.u32 %v297, 127
      %vm299 = vcmp.lt.s32.totalorder %v298, 32
      %v300 = vsel %vm299, 1, 0
      %vm301 = vcmp.eq.s32.totalorder %v300, 1
      %v302 = vsel %vm301, %v295, 0.0
      %v303 = vsel %vm301, %v296, 0.0
      %v304 = vmul.f32 %v302, %v302
      %v305 = vmul.f32 %v303, %v303
      %306 = vadd.xlane.f32.xlu0 %v304
      %v307 = vpop.xlane.xlu0 %306
      %308 = vadd.xlane.f32.xlu0 %v305
      %v309 = vpop.xlane.xlu0 %308
      %v310 = vmul.f32 %v307, 0.03125
      %v311 = vmul.f32 %v309, 0.03125
      %v312 = vadd.f32 %v310, 1e-06
      %v313 = vadd.f32 %v311, 1e-06
      %v314 = vrsqrt.pop %v312
      %v315 = vrsqrt.pop %v313
      %v316 = vmul.f32 %v302, %v314
      %v317 = vmul.f32 %v303, %v315
      %v318 = vld [vmem:[%s5] sm:$0x1]
      %v320 = vlaneseq
      %v321 = vshrl.u32 %v320, 7
      %v322 = vsub.s32 0, %v321
      %v323 = vrot.slane %v318, %v322
      %v325 = vmul.f32 %v316, %v323
      %v326 = vmul.f32 %v317, %v323
      %v327 = vld [vmem:[%s6] sm:$0x1]
      %v329 = vlaneseq
      %v330 = vshrl.u32 %v329, 7
      %v331 = vsub.s32 0, %v330
      %v332 = vrot.slane %v327, %v331
      %v334 = vadd.f32 %v325, %v332
      %v335 = vadd.f32 %v326, %v332
      %336 = vst [vmem:[#allocation9] sm:$0xff] %v334
      %337 = vst [vmem:[#allocation9 + $0x8] sm:$0xff] %v335
    $region49: #{tpu_custom_call.1} parent=1 // pred_fallthru
      _
    // Predicated region
    $region50: #{tpu_custom_call.1} parent=1 // pred_check
      _
    $region51: #{tpu_custom_call.1} parent=1 // pred_check_branch
      %339 = sbr.rel (0) target = $region53
    $region52: #{tpu_custom_call.1} parent=1 // pred_region
      %s341 = ssub.s32 256, 256
      %342 = vsyncadd [#allocation5], %s341
      %s343 = sshll.u32 [#allocation9], 4
      %s344 = int_to_ptr.vmem [resolvable:$true] %s343
      %349 = dma.vmem_to_hbm [thread:$0]  %s344, 256, %s7, [#allocation5], 128, 128, 8
    $region53: #{tpu_custom_call.1} parent=1 // pred_fallthru
      _
    // Predicated region
    $region54: #{tpu_custom_call.1} parent=1 // pred_check
      _
    $region55: #{tpu_custom_call.1} parent=1 // pred_check_branch
      %351 = sbr.rel (0) target = $region57
    $region56: #{tpu_custom_call.1} parent=1 // pred_region
      %352 = dma.done [#allocation5], 256
    $region57: #{tpu_custom_call.1} parent=1 // pred_fallthru
      _
    %353 = vsyncpa [#allocation4], 1
    %354 = vsyncpa [#allocation7], 1
    %355 = vsyncpa [#allocation5], 1

// kernel: tpu_custom_call.1
$region0: #{tpu_custom_call.1}
  #allocation0 [shape = 'u32[]', space=smem, size = 0x4, offset = 0x4, fixed_abs, tag = 'smem constant byte address 0x4 - core index']
  #allocation1 [shape = 'u32[144,128]{1,0:T(1,128)}', space=vmem, size = 0x12000, scoped, tag = 'internal scratch']
  #allocation2 [shape = 'f32[16,128]{1,0:T(8,128)}', space=vmem, size = 0x2000, scoped, tag = 'scratch operand']
  %s0 = inlined_call_operand.hbm [shape: f32[16,128], index: 0, kind: input, shape index: {}]
  %s1 = inlined_call_operand.hbm [shape: f32[128,128], index: 1, kind: input, shape index: {}]
  %s2 = inlined_call_operand.vmem [shape: f32[1,128], index: 2, kind: input, shape index: {}]
  %s3 = inlined_call_operand.hbm [shape: f32[128,128], index: 3, kind: input, shape index: {}]
  %s4 = inlined_call_operand.vmem [shape: f32[1,128], index: 4, kind: input, shape index: {}]
  %s5 = inlined_call_operand.vmem [shape: f32[1,128], index: 5, kind: input, shape index: {}]
  %s6 = inlined_call_operand.vmem [shape: f32[1,128], index: 6, kind: input, shape index: {}]
  %s7 = inlined_call_operand.hbm [shape: f32[16,128], index: 7, kind: output, shape index: {}]
  %s8 = sld [smem:[#allocation0]]
  $region58: #{tpu_custom_call.1} parent=0
    _
  %s10 = ssub.s32 1, %s8
  %s11 = scalar_select 0, %s10, %s8
  $region1: #{tpu_custom_call.1} parent=0
    #allocation3 [shape = 'u8[8192]{0}', space=vmem, size = 0x2000, scoped, tag = 'input window, operand 0, single buffered']
    #allocation4 [shape = 's32[1]{0}', space=sflag, size = 0x4, scoped, tag = 'scoped memory for tpu_custom_call.1']
    #allocation5 [shape = 's32[1]{0}', space=sflag, size = 0x4, scoped, tag = 'scoped memory for tpu_custom_call.1']
    #allocation6 [shape = 'u8[65536]{0}', space=vmem, size = 0x10000, scoped, tag = 'input window, operand 1, single buffered']
    #allocation7 [shape = 's32[1]{0}', space=sflag, size = 0x4, scoped, tag = 'scoped memory for tpu_custom_call.1']
    #allocation8 [shape = 'u8[65536]{0}', space=vmem, size = 0x10000, scoped, tag = 'input window, operand 3, single buffered']
    #allocation9 [shape = 'u8[8192]{0}', space=vmem, size = 0x2000, scoped, tag = 'output window, operand 0, single buffered']
    %12 = vsyncpa [#allocation4], 0
    %13 = vsyncpa [#allocation7], 0
    %14 = vsyncpa [#allocation5], 0
    // Predicated region
    $region2: #{tpu_custom_call.1} parent=1 // pred_check
      _
    $region3: #{tpu_custom_call.1} parent=1 // pred_check_branch
      %16 = sbr.rel (0) target = $region5
    $region4: #{tpu_custom_call.1} parent=1 // pred_region
      %s18 = ssub.s32 256, 256
      %19 = vsyncadd [#allocation4], %s18
      %s20 = sshll.u32 [#allocation3], 4
      %s21 = int_to_ptr.vmem [resolvable:$true] %s20
      %26 = dma.hbm_to_vmem [thread:$0]  %s0, 256, %s21, [#allocation4], 128, 128, 8
    $region5: #{tpu_custom_call.1} parent=1 // pred_fallthru
      _
    // Predicated region
    $region6: #{tpu_custom_call.1} parent=1 // pred_check
      _
    $region7: #{tpu_custom_call.1} parent=1 // pred_check_branch
      %28 = sbr.rel (0) target = $region9
    $region8: #{tpu_custom_call.1} parent=1 // pred_region
      %s30 = ssub.s32 2048, 2048
      %31 = vsyncadd [#allocation7], %s30
      %s32 = sshll.u32 [#allocation6], 4
      %s33 = int_to_ptr.vmem [resolvable:$true] %s32
      %38 = dma.hbm_to_vmem [thread:$0]  %s1, 2048, %s33, [#allocation7], 128, 128, 8
    $region9: #{tpu_custom_call.1} parent=1 // pred_fallthru
      _
    // Predicated region
    $region10: #{tpu_custom_call.1} parent=1 // pred_check
      _
    $region11: #{tpu_custom_call.1} parent=1 // pred_check_branch
      %40 = sbr.rel (0) target = $region13
    $region12: #{tpu_custom_call.1} parent=1 // pred_region
      _
    $region13: #{tpu_custom_call.1} parent=1 // pred_fallthru
      _
    // Predicated region
    $region14: #{tpu_custom_call.1} parent=1 // pred_check
      _
    $region15: #{tpu_custom_call.1} parent=1 // pred_check_branch
      %42 = sbr.rel (0) target = $region17
    $region16: #{tpu_custom_call.1} parent=1 // pred_region
      %s44 = ssub.s32 2048, 2048
      %45 = vsyncadd [#allocation7], %s44
      %s46 = sshll.u32 [#allocation8], 4
      %s47 = int_to_ptr.vmem [resolvable:$true] %s46
      %52 = dma.hbm_to_vmem [thread:$0]  %s3, 2048, %s47, [#allocation7], 128, 128, 8
    $region17: #{tpu_custom_call.1} parent=1 // pred_fallthru
      _
    // Predicated region
    $region18: #{tpu_custom_call.1} parent=1 // pred_check
      _
    $region19: #{tpu_custom_call.1} parent=1 // pred_check_branch
      %54 = sbr.rel (0) target = $region21
    $region20: #{tpu_custom_call.1} parent=1 // pred_region
      _
    $region21: #{tpu_custom_call.1} parent=1 // pred_fallthru
      _
    // Predicated region
    $region22: #{tpu_custom_call.1} parent=1 // pred_check
      _
    $region23: #{tpu_custom_call.1} parent=1 // pred_check_branch
      %56 = sbr.rel (0) target = $region25
    $region24: #{tpu_custom_call.1} parent=1 // pred_region
      _
    $region25: #{tpu_custom_call.1} parent=1 // pred_fallthru
      _
    // Predicated region
    $region26: #{tpu_custom_call.1} parent=1 // pred_check
      _
    $region27: #{tpu_custom_call.1} parent=1 // pred_check_branch
      %58 = sbr.rel (0) target = $region29
    $region28: #{tpu_custom_call.1} parent=1 // pred_region
      _
    $region29: #{tpu_custom_call.1} parent=1 // pred_fallthru
      _
    // Predicated region
    $region30: #{tpu_custom_call.1} parent=1 // pred_check
      _
    $region31: #{tpu_custom_call.1} parent=1 // pred_check_branch
      %60 = sbr.rel (0) target = $region33
    $region32: #{tpu_custom_call.1} parent=1 // pred_region
      %61 = dma.done [#allocation4], 256
    $region33: #{tpu_custom_call.1} parent=1 // pred_fallthru
      _
    // Predicated region
    $region34: #{tpu_custom_call.1} parent=1 // pred_check
      _
    $region35: #{tpu_custom_call.1} parent=1 // pred_check_branch
      %63 = sbr.rel (0) target = $region37
    $region36: #{tpu_custom_call.1} parent=1 // pred_region
      %64 = dma.done [#allocation7], 2048
    $region37: #{tpu_custom_call.1} parent=1 // pred_fallthru
      _
    // Predicated region
    $region38: #{tpu_custom_call.1} parent=1 // pred_check
      _
    $region39: #{tpu_custom_call.1} parent=1 // pred_check_branch
      %66 = sbr.rel (0) target = $region41
    $region40: #{tpu_custom_call.1} parent=1 // pred_region
      %67 = dma.done [#allocation7], 2048
    $region41: #{tpu_custom_call.1} parent=1 // pred_fallthru
      _
    %p68 = scmp.eq.s32.totalorder 0, 0
    // Predicated region
    $region42: #{tpu_custom_call.1} parent=1 // pred_check
      %p69 = pneg %p68
    $region43: #{tpu_custom_call.1} parent=1 // pred_check_branch
      %71 = sbr.rel (%p69) target = $region45
    $region44: #{tpu_custom_call.1} parent=1 // pred_region
      %72 = vst [vmem:[#allocation2] sm:$0xff] 0.0
      %73 = vst [vmem:[#allocation2 + $0x8] sm:$0xff] 0.0
    $region45: #{tpu_custom_call.1} parent=1 // pred_fallthru
      _
    %v74 = vld [vmem:[#allocation3] sm:$0xff]
    %v75 = vld [vmem:[#allocation3 + $0x8] sm:$0xff]
    %v76 = vld [vmem:[#allocation6] sm:$0xff]
    %v77 = vld [vmem:[#allocation6 + $0x8] sm:$0xff]
    %v78 = vld [vmem:[#allocation6 + $0x10] sm:$0xff]
    %v79 = vld [vmem:[#allocation6 + $0x18] sm:$0xff]
    %v80 = vld [vmem:[#allocation6 + $0x20] sm:$0xff]
    %v81 = vld [vmem:[#allocation6 + $0x28] sm:$0xff]
    %v82 = vld [vmem:[#allocation6 + $0x30] sm:$0xff]
    %v83 = vld [vmem:[#allocation6 + $0x38] sm:$0xff]
    %v84 = vld [vmem:[#allocation6 + $0x40] sm:$0xff]
    %v85 = vld [vmem:[#allocation6 + $0x48] sm:$0xff]
    %v86 = vld [vmem:[#allocation6 + $0x50] sm:$0xff]
    %v87 = vld [vmem:[#allocation6 + $0x58] sm:$0xff]
    %v88 = vld [vmem:[#allocation6 + $0x60] sm:$0xff]
    %v89 = vld [vmem:[#allocation6 + $0x68] sm:$0xff]
    %v90 = vld [vmem:[#allocation6 + $0x70] sm:$0xff]
    %v91 = vld [vmem:[#allocation6 + $0x78] sm:$0xff]
    %v92 = vld [vmem:[%s2] sm:$0x1]
    %v94 = vlaneseq
    %v95 = vshrl.u32 %v94, 7
    %v96 = vsub.s32 0, %v95
    %v97 = vrot.slane %v92, %v96
    %99 = vmatprep.subr.mxu0 0.0
    %100 = vmatpush1.msra.mxu0 %v76
    %101 = vmatprep.subr.mxu0 0.0
    %102 = vmatpush1.msra.mxu0 %v77
    %103 = vmatprep.subr.mxu0 0.0
    %104 = vmatpush1.msra.mxu0 %v78
    %105 = vmatprep.subr.mxu0 0.0
    %106 = vmatpush1.msra.mxu0 %v79
    %107 = vmatprep.subr.mxu0 0.0
    %108 = vmatpush1.msra.mxu0 %v80
    %109 = vmatprep.subr.mxu0 0.0
    %110 = vmatpush1.msra.mxu0 %v81
    %111 = vmatprep.subr.mxu0 0.0
    %112 = vmatpush1.msra.mxu0 %v82
    %113 = vmatprep.subr.mxu0 0.0
    %114 = vmatpush1.msra.mxu0 %v83
    %115 = vmatprep.subr.mxu0 0.0
    %116 = vmatpush1.msra.mxu0 %v84
    %117 = vmatprep.subr.mxu0 0.0
    %118 = vmatpush1.msra.mxu0 %v85
    %119 = vmatprep.subr.mxu0 0.0
    %120 = vmatpush1.msra.mxu0 %v86
    %121 = vmatprep.subr.mxu0 0.0
    %122 = vmatpush1.msra.mxu0 %v87
    %123 = vmatprep.subr.mxu0 0.0
    %124 = vmatpush1.msra.mxu0 %v88
    %125 = vmatprep.subr.mxu0 0.0
    %126 = vmatpush1.msra.mxu0 %v89
    %127 = vmatprep.subr.mxu0 0.0
    %128 = vmatpush1.msra.mxu0 %v90
    %129 = vmatprep.subr.mxu0 0.0
    %130 = vmatpush1.msra.mxu0 %v91
    %131 = vmatprep.subr.mxu0 0.0
    %132 = vmatpush1.msra.mxu0 0.0
    %133 = vmatprep.subr.mxu0 0.0
    %134 = vmatpush1.msra.mxu0 0.0
    %135 = vmatprep.subr.mxu0 0.0
    %136 = vmatpush1.msra.mxu0 0.0
    %137 = vmatprep.subr.mxu0 0.0
    %138 = vmatpush1.msra.mxu0 0.0
    %139 = vmatprep.subr.mxu0 0.0
    %140 = vmatpush1.msra.mxu0 0.0
    %141 = vmatprep.subr.mxu0 0.0
    %142 = vmatpush1.msra.mxu0 0.0
    %143 = vmatprep.subr.mxu0 0.0
    %144 = vmatpush1.msra.mxu0 0.0
    %145 = vmatprep.subr.mxu0 0.0
    %146 = vmatpush1.msra.mxu0 0.0
    %147 = vmatprep.subr.mxu0 0.0
    %148 = vmatpush1.msra.mxu0 0.0
    %149 = vmatprep.subr.mxu0 0.0
    %150 = vmatpush1.msra.mxu0 0.0
    %151 = vmatprep.subr.mxu0 0.0
    %152 = vmatpush1.msra.mxu0 0.0
    %153 = vmatprep.subr.mxu0 0.0
    %154 = vmatpush1.msra.mxu0 0.0
    %155 = vmatprep.subr.mxu0 0.0
    %156 = vmatpush1.msra.mxu0 0.0
    %157 = vmatprep.subr.mxu0 0.0
    %158 = vmatpush1.msra.mxu0 0.0
    %159 = vmatprep.subr.mxu0 0.0
    %160 = vmatpush1.msra.mxu0 0.0
    %161 = vmatprep.subr.mxu0 0.0
    %162 = vmatpush1.msra.mxu0 0.0
    %163 = vmatprep.mubr.f32.mxu0 0.0
    %164 = vmatmul.mubr.f32.gmra.mrb[0].mxu0 %v74
    %v165 = vpop.f32.mrb[0].mxu0
    %v166 = vadd.f32 %v97, %v165
    %v167 = vpop.f32.mrb[0].mxu0
    %168 = vmatprep.mubr.f32.mxu0 0.0
    %169 = vmatmul.mubr.f32.gmra.mrb[0].mxu0 %v75
    %v170 = vpop.f32.mrb[0].mxu0
    %v171 = vadd.f32 %v97, %v170
    %v172 = vpop.f32.mrb[0].mxu0
    %173 = vdwg.mxu0
    %v174 = vmax.f32 %v166, 0.0
    %v175 = vmax.f32 %v171, 0.0
    %v176 = vld [vmem:[#allocation2] sm:$0xff]
    %v177 = vld [vmem:[#allocation2 + $0x8] sm:$0xff]
    %v178 = vld [vmem:[#allocation8] sm:$0xff]
    %v179 = vld [vmem:[#allocation8 + $0x8] sm:$0xff]
    %v180 = vld [vmem:[#allocation8 + $0x10] sm:$0xff]
    %v181 = vld [vmem:[#allocation8 + $0x18] sm:$0xff]
    %v182 = vld [vmem:[#allocation8 + $0x20] sm:$0xff]
    %v183 = vld [vmem:[#allocation8 + $0x28] sm:$0xff]
    %v184 = vld [vmem:[#allocation8 + $0x30] sm:$0xff]
    %v185 = vld [vmem:[#allocation8 + $0x38] sm:$0xff]
    %v186 = vld [vmem:[#allocation8 + $0x40] sm:$0xff]
    %v187 = vld [vmem:[#allocation8 + $0x48] sm:$0xff]
    %v188 = vld [vmem:[#allocation8 + $0x50] sm:$0xff]
    %v189 = vld [vmem:[#allocation8 + $0x58] sm:$0xff]
    %v190 = vld [vmem:[#allocation8 + $0x60] sm:$0xff]
    %v191 = vld [vmem:[#allocation8 + $0x68] sm:$0xff]
    %v192 = vld [vmem:[#allocation8 + $0x70] sm:$0xff]
    %v193 = vld [vmem:[#allocation8 + $0x78] sm:$0xff]
    %194 = vmatprep.subr.mxu0 0.0
    %195 = vmatpush1.msra.mxu0 %v178
    %196 = vmatprep.subr.mxu0 0.0
    %197 = vmatpush1.msra.mxu0 %v179
    %198 = vmatprep.subr.mxu0 0.0
    %199 = vmatpush1.msra.mxu0 %v180
    %200 = vmatprep.subr.mxu0 0.0
    %201 = vmatpush1.msra.mxu0 %v181
    %202 = vmatprep.subr.mxu0 0.0
    %203 = vmatpush1.msra.mxu0 %v182
    %204 = vmatprep.subr.mxu0 0.0
    %205 = vmatpush1.msra.mxu0 %v183
    %206 = vmatprep.subr.mxu0 0.0
    %207 = vmatpush1.msra.mxu0 %v184
    %208 = vmatprep.subr.mxu0 0.0
    %209 = vmatpush1.msra.mxu0 %v185
    %210 = vmatprep.subr.mxu0 0.0
    %211 = vmatpush1.msra.mxu0 %v186
    %212 = vmatprep.subr.mxu0 0.0
    %213 = vmatpush1.msra.mxu0 %v187
    %214 = vmatprep.subr.mxu0 0.0
    %215 = vmatpush1.msra.mxu0 %v188
    %216 = vmatprep.subr.mxu0 0.0
    %217 = vmatpush1.msra.mxu0 %v189
    %218 = vmatprep.subr.mxu0 0.0
    %219 = vmatpush1.msra.mxu0 %v190
    %220 = vmatprep.subr.mxu0 0.0
    %221 = vmatpush1.msra.mxu0 %v191
    %222 = vmatprep.subr.mxu0 0.0
    %223 = vmatpush1.msra.mxu0 %v192
    %224 = vmatprep.subr.mxu0 0.0
    %225 = vmatpush1.msra.mxu0 %v193
    %226 = vmatprep.subr.mxu0 0.0
    %227 = vmatpush1.msra.mxu0 0.0
    %228 = vmatprep.subr.mxu0 0.0
    %229 = vmatpush1.msra.mxu0 0.0
    %230 = vmatprep.subr.mxu0 0.0
    %231 = vmatpush1.msra.mxu0 0.0
    %232 = vmatprep.subr.mxu0 0.0
    %233 = vmatpush1.msra.mxu0 0.0
    %234 = vmatprep.subr.mxu0 0.0
    %235 = vmatpush1.msra.mxu0 0.0
    %236 = vmatprep.subr.mxu0 0.0
    %237 = vmatpush1.msra.mxu0 0.0
    %238 = vmatprep.subr.mxu0 0.0
    %239 = vmatpush1.msra.mxu0 0.0
    %240 = vmatprep.subr.mxu0 0.0
    %241 = vmatpush1.msra.mxu0 0.0
    %242 = vmatprep.subr.mxu0 0.0
    %243 = vmatpush1.msra.mxu0 0.0
    %244 = vmatprep.subr.mxu0 0.0
    %245 = vmatpush1.msra.mxu0 0.0
    %246 = vmatprep.subr.mxu0 0.0
    %247 = vmatpush1.msra.mxu0 0.0
    %248 = vmatprep.subr.mxu0 0.0
    %249 = vmatpush1.msra.mxu0 0.0
    %250 = vmatprep.subr.mxu0 0.0
    %251 = vmatpush1.msra.mxu0 0.0
    %252 = vmatprep.subr.mxu0 0.0
    %253 = vmatpush1.msra.mxu0 0.0
    %254 = vmatprep.subr.mxu0 0.0
    %255 = vmatpush1.msra.mxu0 0.0
    %256 = vmatprep.subr.mxu0 0.0
    %257 = vmatpush1.msra.mxu0 0.0
    %258 = vmatprep.mubr.f32.mxu0 0.0
    %259 = vmatmul.mubr.f32.gmra.mrb[0].mxu0 %v174
    %v260 = vpop.f32.mrb[0].mxu0
    %v261 = vadd.f32 0.0, %v260
    %v262 = vpop.f32.mrb[0].mxu0
    %263 = vmatprep.mubr.f32.mxu0 0.0
    %264 = vmatmul.mubr.f32.gmra.mrb[0].mxu0 %v175
    %v265 = vpop.f32.mrb[0].mxu0
    %v266 = vadd.f32 0.0, %v265
    %v267 = vpop.f32.mrb[0].mxu0
    %268 = vdwg.mxu0
    %v269 = vadd.f32 %v176, %v261
    %v270 = vadd.f32 %v177, %v266
    %271 = vst [vmem:[#allocation2] sm:$0xff] %v269
    %272 = vst [vmem:[#allocation2 + $0x8] sm:$0xff] %v270
    // Predicated region
    $region46: #{tpu_custom_call.1} parent=1 // pred_check
      %p273 = pneg %p68
    $region47: #{tpu_custom_call.1} parent=1 // pred_check_branch
      %275 = sbr.rel (%p273) target = $region49
    $region48: #{tpu_custom_call.1} parent=1 // pred_region
      %v276 = vld [vmem:[#allocation2] sm:$0xff]
      %v277 = vld [vmem:[#allocation2 + $0x8] sm:$0xff]
      %v278 = vld [vmem:[%s4] sm:$0x1]
      %v280 = vlaneseq
      %v281 = vshrl.u32 %v280, 7
      %v282 = vsub.s32 0, %v281
      %v283 = vrot.slane %v278, %v282
      %v285 = vadd.f32 %v276, %v283
      %v286 = vadd.f32 %v277, %v283
      %v287 = vadd.f32 %v285, %v74
      %v288 = vadd.f32 %v286, %v75
      %289 = vadd.xlane.f32.xlu0 %v287
      %v290 = vpop.xlane.xlu0 %289
      %291 = vadd.xlane.f32.xlu0 %v288
      %v292 = vpop.xlane.xlu0 %291
      %v293 = vmul.f32 %v290, 0.03125
      %v294 = vmul.f32 %v292, 0.03125
      %v295 = vsub.f32 %v287, %v293
      %v296 = vsub.f32 %v288, %v294
      %v297 = vlaneseq
      %v298 = vand.u32 %v297, 127
      %vm299 = vcmp.lt.s32.totalorder %v298, 32
      %v300 = vsel %vm299, 1, 0
      %vm301 = vcmp.eq.s32.totalorder %v300, 1
      %v302 = vsel %vm301, %v295, 0.0
      %v303 = vsel %vm301, %v296, 0.0
      %v304 = vmul.f32 %v302, %v302
      %v305 = vmul.f32 %v303, %v303
      %306 = vadd.xlane.f32.xlu0 %v304
      %v307 = vpop.xlane.xlu0 %306
      %308 = vadd.xlane.f32.xlu0 %v305
      %v309 = vpop.xlane.xlu0 %308
      %v310 = vmul.f32 %v307, 0.03125
      %v311 = vmul.f32 %v309, 0.03125
      %v312 = vadd.f32 %v310, 1e-06
      %v313 = vadd.f32 %v311, 1e-06
      %v314 = vrsqrt.pop %v312
      %v315 = vrsqrt.pop %v313
      %v316 = vmul.f32 %v302, %v314
      %v317 = vmul.f32 %v303, %v315
      %v318 = vld [vmem:[%s5] sm:$0x1]
      %v320 = vlaneseq
      %v321 = vshrl.u32 %v320, 7
      %v322 = vsub.s32 0, %v321
      %v323 = vrot.slane %v318, %v322
      %v325 = vmul.f32 %v316, %v323
      %v326 = vmul.f32 %v317, %v323
      %v327 = vld [vmem:[%s6] sm:$0x1]
      %v329 = vlaneseq
      %v330 = vshrl.u32 %v329, 7
      %v331 = vsub.s32 0, %v330
      %v332 = vrot.slane %v327, %v331
      %v334 = vadd.f32 %v325, %v332
      %v335 = vadd.f32 %v326, %v332
      %336 = vst [vmem:[#allocation9] sm:$0xff] %v334
      %337 = vst [vmem:[#allocation9 + $0x8] sm:$0xff] %v335
    $region49: #{tpu_custom_call.1} parent=1 // pred_fallthru
      _
    // Predicated region
    $region50: #{tpu_custom_call.1} parent=1 // pred_check
      _
    $region51: #{tpu_custom_call.1} parent=1 // pred_check_branch
      %339 = sbr.rel (0) target = $region53
    $region52: #{tpu_custom_call.1} parent=1 // pred_region
      %s341 = ssub.s32 256, 256
      %342 = vsyncadd [#allocation5], %s341
      %s343 = sshll.u32 [#allocation9], 4
      %s344 = int_to_ptr.vmem [resolvable:$true] %s343
      %349 = dma.vmem_to_hbm [thread:$0]  %s344, 256, %s7, [#allocation5], 128, 128, 8
    $region53: #{tpu_custom_call.1} parent=1 // pred_fallthru
      _
    // Predicated region
    $region54: #{tpu_custom_call.1} parent=1 // pred_check
      _
    $region55: #{tpu_custom_call.1} parent=1 // pred_check_branch
      %351 = sbr.rel (0) target = $region57
    $region56: #{tpu_custom_call.1} parent=1 // pred_region
      %352 = dma.done [#allocation5], 256
    $region57: #{tpu_custom_call.1} parent=1 // pred_fallthru
      _
    %353 = vsyncpa [#allocation4], 1
    %354 = vsyncpa [#allocation7], 1
    %355 = vsyncpa [#allocation5], 1

</llo_original>
